<compile_context>
chip_gen: v7x
topology: tpu7x:2x2x1
jax: 0.10.0
libtpu: 0.0.40
codegen_flags: <defaults>
</compile_context>

<pallas_src>
import jax
import jax.numpy as jnp
from jax import lax
from jax.experimental import pallas as pl
from jax.experimental.pallas import tpu as pltpu


def _critic_fwd_kernel(x_ref, w_ref, o_ref):
    # x_ref: (Bblk, C) f32, w_ref: (A, C) f32 (nn.Linear layout), o_ref: (Bblk, A) f32
    x = x_ref[...]
    w = w_ref[...]
    # logits = x @ w.T without materializing the transpose: contract dim 1 of x
    # with dim 1 of w (NT matmul straight into the MXU).
    logits = lax.dot_general(
        x, w,
        dimension_numbers=(((1,), (1,)), ((), ())),
        preferred_element_type=jnp.float32,
    )
    # Numerically-stable softmax over the action axis.  Exact divide: the
    # approx reciprocal was the source of the previous accuracy failure.
    m = jnp.max(logits, axis=-1, keepdims=True)
    e = jnp.exp(logits - m)
    probs = e / jnp.sum(e, axis=-1, keepdims=True)
    o_ref[...] = probs.astype(o_ref.dtype)


def critic_decision_forward(predictions, fc_weight, *, block_b=512):
    """Pallas implementation of CriticDecision.forward.

    predictions: (B, num_classes) float32
    fc_weight:   (num_action, num_classes) float32 (nn.Linear weight layout)
    returns:     (B, num_action) float32 softmax weights
    """
    B, C = predictions.shape
    A, C2 = fc_weight.shape
    assert C == C2
    predictions = predictions.astype(jnp.float32)
    fc_weight = fc_weight.astype(jnp.float32)

    cost = pl.CostEstimate(
        flops=2 * B * C * A + 4 * B * A,
        transcendentals=B * A,
        bytes_accessed=4 * (B * C + A * C + B * A),
    )

    # Tile over the batch only when it pays off (big B, evenly divisible);
    # otherwise process everything as a single block — tiny shapes are
    # latency-bound and fixed pallas_call overhead dominates.
    if B >= 2 * block_b and B % block_b == 0:
        bb = block_b
        grid = (B // bb,)
    else:
        bb = B
        grid = (1,)

    return pl.pallas_call(
        _critic_fwd_kernel,
        out_shape=jax.ShapeDtypeStruct((B, A), jnp.float32),
        grid=grid,
        in_specs=[
            pl.BlockSpec((bb, C), lambda i: (i, 0)),
            pl.BlockSpec((A, C), lambda i: (0, 0)),
        ],
        out_specs=pl.BlockSpec((bb, A), lambda i: (i, 0)),
        compiler_params=pltpu.CompilerParams(
            dimension_semantics=("parallel",)),
        cost_estimate=cost,
    )(predictions, fc_weight)


if __name__ == "__main__":
    key = jax.random.PRNGKey(0)
    kx, kw, kw2 = jax.random.split(key, 3)

    # Small stand-ins for (num_classes=1000, num_action=2) defaults.
    num_classes = 32
    batch = 8
    bound = 1.0 / jnp.sqrt(num_classes)

    predictions = jax.random.normal(kx, (batch, num_classes), dtype=jnp.float32)

    # --- num_action == 2 (module default) ---
    num_action = 2
    fc_weight = jax.random.uniform(
        kw, (num_action, num_classes), minval=-bound, maxval=bound, dtype=jnp.float32
    )
    # self.adjustment is a non-trainable parameter not used in forward();
    # kept only for shape parity with the module.
    adjustment = jnp.zeros((num_action, num_classes), dtype=jnp.float32)
    # TODO(synk): optimize()/evaluate_soft_diff/evaluate_adjustment (Adam training
    # loop, one_hot, matrix inverse) are host-side training utilities, not part of
    # forward(); not ported to Pallas.

    out = critic_decision_forward(predictions, fc_weight)
    jax.block_until_ready(out)
    ref = jax.nn.softmax(predictions @ fc_weight.T, axis=1)
    assert out.shape == (batch, num_action)
    assert jnp.allclose(out, ref, atol=1e-5, rtol=1e-5)

    # --- general num_action path (A != 2) ---
    num_action4 = 4
    fc_weight4 = jax.random.uniform(
        kw2, (num_action4, num_classes), minval=-bound, maxval=bound, dtype=jnp.float32
    )
    out4 = critic_decision_forward(predictions, fc_weight4)
    jax.block_until_ready(out4)
    ref4 = jax.nn.softmax(predictions @ fc_weight4.T, axis=1)
    assert out4.shape == (batch, num_action4)
    assert jnp.allclose(out4, ref4, atol=1e-5, rtol=1e-5)

    print("KERNEL_OK")
</pallas_src>

<mosaic_0001>
module attributes {stable_mosaic.version = 11 : i64} {
  func.func @_critic_fwd_kernel(%arg0: i32, %arg1: memref<8x32xf32, #tpu.memory_space<vmem>>, %arg2: memref<2x32xf32, #tpu.memory_space<vmem>>, %arg3: memref<8x2xf32, #tpu.memory_space<vmem>>) attributes {dimension_semantics = [#tpu.dimension_semantics<parallel>], iteration_bounds = array<i64: 1>, scalar_prefetch = 0 : i64, scratch_operands = 0 : i64, tpu.core_type = #tpu.core_type<tc>, window_params = [{transform_indices = @transform_0, window_bounds = array<i64: 8, 32>}, {pipeline_mode = #tpu.pipeline_mode<synchronous>, transform_indices = @transform_1, window_bounds = array<i64: 2, 32>}, {transform_indices = @transform_2, window_bounds = array<i64: 8, 2>}]} {
    %c0 = arith.constant 0 : index
    %c0_0 = arith.constant 0 : index
    %0 = vector.load %arg1[%c0, %c0_0] : memref<8x32xf32, #tpu.memory_space<vmem>>, vector<8x32xf32>
    %c0_1 = arith.constant 0 : index
    %c0_2 = arith.constant 0 : index
    %1 = vector.load %arg2[%c0_1, %c0_2] : memref<2x32xf32, #tpu.memory_space<vmem>>, vector<2x32xf32>
    %cst = arith.constant dense<0.000000e+00> : vector<8x2xf32>
    %2 = tpu.matmul %0, %1, %cst {dimension_numbers = #tpu.dot_dimension_numbers<[1], [1], [0], [0], [0, 0, 1, 0], [], []>} : vector<8x32xf32>, vector<2x32xf32>, vector<8x2xf32> -> vector<8x2xf32>
    %cst_3 = arith.constant dense<0xFF800000> : vector<8xf32>
    %3 = vector.multi_reduction <maximumf>, %2, %cst_3 [1] : vector<8x2xf32> to vector<8xf32>
    %4 = vector.shape_cast %3 : vector<8xf32> to vector<8x1xf32>
    %5 = vector.broadcast %4 : vector<8x1xf32> to vector<8x2xf32>
    %6 = arith.subf %2, %5 : vector<8x2xf32>
    %7 = math.exp %6 : vector<8x2xf32>
    %cst_4 = arith.constant dense<0.000000e+00> : vector<8xf32>
    %8 = vector.multi_reduction <add>, %7, %cst_4 [1] : vector<8x2xf32> to vector<8xf32>
    %9 = vector.shape_cast %8 : vector<8xf32> to vector<8x1xf32>
    %10 = vector.broadcast %9 : vector<8x1xf32> to vector<8x2xf32>
    %11 = arith.divf %7, %10 : vector<8x2xf32>
    %c0_5 = arith.constant 0 : index
    %c0_6 = arith.constant 0 : index
    %12 = vector.load %arg3[%c0_5, %c0_6] : memref<8x2xf32, #tpu.memory_space<vmem>>, vector<8x2xf32>
    tpu.vector_store %arg3[%c0_5, %c0_6], %11 {strides = array<i32>} : memref<8x2xf32, #tpu.memory_space<vmem>>, vector<8x2xf32>,
    return
  }
  func.func @transform_0(%arg0: i32) -> (i32, i32) {
    %c0_i32 = arith.constant 0 : i32
    %c0_i32_0 = arith.constant 0 : i32
    return %arg0, %c0_i32 : i32, i32
  }
  func.func @transform_1(%arg0: i32) -> (i32, i32) {
    %c0_i32 = arith.constant 0 : i32
    %c0_i32_0 = arith.constant 0 : i32
    %c0_i32_1 = arith.constant 0 : i32
    return %c0_i32, %c0_i32_0 : i32, i32
  }
  func.func @transform_2(%arg0: i32) -> (i32, i32) {
    %c0_i32 = arith.constant 0 : i32
    %c0_i32_0 = arith.constant 0 : i32
    return %arg0, %c0_i32 : i32, i32
  }
}

</mosaic_0001>

<llo_original>
// kernel: tpu_custom_call.1
$region0: #{tpu_custom_call.1}
  #allocation0 [shape = 'u32[]', space=smem, size = 0x4, offset = 0x4, fixed_abs, tag = 'smem constant byte address 0x4 - core index']
  #allocation1 [shape = 'u32[144,128]{1,0:T(1,128)}', space=vmem, size = 0x12000, scoped, tag = 'internal scratch']
  %s0 = inlined_call_operand.hbm [shape: f32[8,32], index: 0, kind: input, shape index: {}]
  %s1 = inlined_call_operand.vmem [shape: f32[2,32], index: 1, kind: input, shape index: {}]
  %s2 = inlined_call_operand.vmem [shape: f32[8,2], index: 2, kind: output, shape index: {}]
  %s3 = sld [smem:[#allocation0]]
  $region22: #{tpu_custom_call.1} parent=0
    _
  %s5 = ssub.s32 1, %s3
  %s6 = scalar_select 0, %s5, %s3
  $region1: #{tpu_custom_call.1} parent=0
    #allocation2 [shape = 'u8[4096]{0}', space=vmem, size = 0x1000, scoped, tag = 'input window, operand 0, single buffered']
    #allocation3 [shape = 's32[1]{0}', space=sflag, size = 0x4, scoped, tag = 'scoped memory for tpu_custom_call.1']
    %7 = vsyncpa [#allocation3], 0
    // Predicated region
    $region2: #{tpu_custom_call.1} parent=1 // pred_check
      _
    $region3: #{tpu_custom_call.1} parent=1 // pred_check_branch
      %9 = sbr.rel (0) target = $region5
    $region4: #{tpu_custom_call.1} parent=1 // pred_region
      %s11 = ssub.s32 128, 128
      %12 = vsyncadd [#allocation3], %s11
      %s14 = sshll.u32 [#allocation2], 4
      %s15 = int_to_ptr.vmem [resolvable:$true] %s14
      %17 = dma.hbm_to_vmem [thread:$0]  %s0, 128, %s15, [#allocation3]
    $region5: #{tpu_custom_call.1} parent=1 // pred_fallthru
      _
    // Predicated region
    $region6: #{tpu_custom_call.1} parent=1 // pred_check
      _
    $region7: #{tpu_custom_call.1} parent=1 // pred_check_branch
      %19 = sbr.rel (0) target = $region9
    $region8: #{tpu_custom_call.1} parent=1 // pred_region
      _
    $region9: #{tpu_custom_call.1} parent=1 // pred_fallthru
      _
    // Predicated region
    $region10: #{tpu_custom_call.1} parent=1 // pred_check
      _
    $region11: #{tpu_custom_call.1} parent=1 // pred_check_branch
      %21 = sbr.rel (0) target = $region13
    $region12: #{tpu_custom_call.1} parent=1 // pred_region
      %22 = dma.done [#allocation3], 128
    $region13: #{tpu_custom_call.1} parent=1 // pred_fallthru
      _
    %v23 = vld [vmem:[#allocation2] sm:$0xff]
    %v24 = vld [vmem:[%s1] sm:$0x3]
    %vm25 = vcmask 261120
    %v27 = vsel %vm25, %v23, 0
    %v30 = vsel %vm25, %v24, 0
    %32 = vmatprep.subr.mxu0 0.0
    %33 = vmatpush1.xpose.msra.mxu0 %v30
    %34 = vmatprep.subr.mxu0 0.0
    %35 = vmatpush1.xpose.msra.mxu0 0.0
    %36 = vmatprep.subr.mxu0 0.0
    %37 = vmatpush1.xpose.msra.mxu0 0.0
    %38 = vmatprep.subr.mxu0 0.0
    %39 = vmatpush1.xpose.msra.mxu0 0.0
    %40 = vmatprep.subr.mxu0 0.0
    %41 = vmatpush1.xpose.msra.mxu0 0.0
    %42 = vmatprep.subr.mxu0 0.0
    %43 = vmatpush1.xpose.msra.mxu0 0.0
    %44 = vmatprep.subr.mxu0 0.0
    %45 = vmatpush1.xpose.msra.mxu0 0.0
    %46 = vmatprep.subr.mxu0 0.0
    %47 = vmatpush1.xpose.msra.mxu0 0.0
    %48 = vmatprep.subr.mxu0 0.0
    %49 = vmatpush1.xpose.msra.mxu0 0.0
    %50 = vmatprep.subr.mxu0 0.0
    %51 = vmatpush1.xpose.msra.mxu0 0.0
    %52 = vmatprep.subr.mxu0 0.0
    %53 = vmatpush1.xpose.msra.mxu0 0.0
    %54 = vmatprep.subr.mxu0 0.0
    %55 = vmatpush1.xpose.msra.mxu0 0.0
    %56 = vmatprep.subr.mxu0 0.0
    %57 = vmatpush1.xpose.msra.mxu0 0.0
    %58 = vmatprep.subr.mxu0 0.0
    %59 = vmatpush1.xpose.msra.mxu0 0.0
    %60 = vmatprep.subr.mxu0 0.0
    %61 = vmatpush1.xpose.msra.mxu0 0.0
    %62 = vmatprep.subr.mxu0 0.0
    %63 = vmatpush1.xpose.msra.mxu0 0.0
    %64 = vmatprep.subr.mxu0 0.0
    %65 = vmatpush1.xpose.msra.mxu0 0.0
    %66 = vmatprep.subr.mxu0 0.0
    %67 = vmatpush1.xpose.msra.mxu0 0.0
    %68 = vmatprep.subr.mxu0 0.0
    %69 = vmatpush1.xpose.msra.mxu0 0.0
    %70 = vmatprep.subr.mxu0 0.0
    %71 = vmatpush1.xpose.msra.mxu0 0.0
    %72 = vmatprep.subr.mxu0 0.0
    %73 = vmatpush1.xpose.msra.mxu0 0.0
    %74 = vmatprep.subr.mxu0 0.0
    %75 = vmatpush1.xpose.msra.mxu0 0.0
    %76 = vmatprep.subr.mxu0 0.0
    %77 = vmatpush1.xpose.msra.mxu0 0.0
    %78 = vmatprep.subr.mxu0 0.0
    %79 = vmatpush1.xpose.msra.mxu0 0.0
    %80 = vmatprep.subr.mxu0 0.0
    %81 = vmatpush1.xpose.msra.mxu0 0.0
    %82 = vmatprep.subr.mxu0 0.0
    %83 = vmatpush1.xpose.msra.mxu0 0.0
    %84 = vmatprep.subr.mxu0 0.0
    %85 = vmatpush1.xpose.msra.mxu0 0.0
    %86 = vmatprep.subr.mxu0 0.0
    %87 = vmatpush1.xpose.msra.mxu0 0.0
    %88 = vmatprep.subr.mxu0 0.0
    %89 = vmatpush1.xpose.msra.mxu0 0.0
    %90 = vmatprep.subr.mxu0 0.0
    %91 = vmatpush1.xpose.msra.mxu0 0.0
    %92 = vmatprep.subr.mxu0 0.0
    %93 = vmatpush1.xpose.msra.mxu0 0.0
    %94 = vmatprep.subr.mxu0 0.0
    %95 = vmatpush1.xpose.msra.mxu0 0.0
    %96 = vmatprep.mubr.f32.mxu0 0.0
    %97 = vmatmul.mubr.f32.gmra.mrb[0].mxu0 %v27
    %v98 = vpop.f32.mrb[0].mxu0
    %v99 = vadd.f32 0.0, %v98
    %v100 = vpop.f32.mrb[0].mxu0
    %101 = vdwg.mxu0
    %vm102 = vcmask 15360
    %v103 = vsel %vm102, %v99, -inf
    %104 = vmax.xlane.f32.xlu0 %v103
    %v105 = vpop.xlane.xlu0 %104
    %v106 = vsub.f32 %v99, %v105
    %v107 = vmul.f32 %v106, 1.442695
    %v108 = vpow.pop %v107
    %v109 = vsel %vm102, %v108, 0.0
    %110 = vadd.xlane.f32.xlu0 %v109
    %v111 = vpop.xlane.xlu0 %110
    %v112 = vrcp.pop %v111
    %v113 = vmul.f32 %v108, %v112
    %114 = vst.msk [vmem:[%s2] sm:$0xff] %vm102, %v113
    // Predicated region
    $region14: #{tpu_custom_call.1} parent=1 // pred_check
      _
    $region15: #{tpu_custom_call.1} parent=1 // pred_check_branch
      %116 = sbr.rel (0) target = $region17
    $region16: #{tpu_custom_call.1} parent=1 // pred_region
      _
    $region17: #{tpu_custom_call.1} parent=1 // pred_fallthru
      _
    // Predicated region
    $region18: #{tpu_custom_call.1} parent=1 // pred_check
      _
    $region19: #{tpu_custom_call.1} parent=1 // pred_check_branch
      %118 = sbr.rel (0) target = $region21
    $region20: #{tpu_custom_call.1} parent=1 // pred_region
      _
    $region21: #{tpu_custom_call.1} parent=1 // pred_fallthru
      _
    %119 = vsyncpa [#allocation3], 1

</llo_original>
